<compile_context>
chip_gen: v7x
topology: tpu7x:2x2x1
jax: 0.10.0
libtpu: 0.0.40
codegen_flags: <defaults>
</compile_context>

<pallas_src>
import functools
from typing import NamedTuple

import numpy as np
import jax
import jax.numpy as jnp
from jax.experimental import pallas as pl
from jax.experimental.pallas import tpu as pltpu

LN_EPS = 1e-5
_MiB = 1024 * 1024


def _round_up(a, b):
    return (a + b - 1) // b * b


def _vmem_capacity_bytes():
    try:
        return int(pltpu.get_tpu_info().vmem_capacity_bytes)
    except Exception:
        return 64 * _MiB          # conservative fallback (v7x per-TC VMEM)


class LMHeadPlan(NamedTuple):
    tm: int                       # token tile (both kernels)
    tv: int                       # vocab tile (kernel 2)
    P_pad: int                    # padded word_embed_proj_dim (multiple of 128)
    V_pad: int                    # padded vocab (multiple of tv)
    vocab: int                    # true vocab size
    logits_dtype: object          # f32 (module-exact) or bf16 (halves K2 writeback)
    vmem_budget_bytes: int        # working-set budget used for tile selection
    vmem_limit_bytes: int         # scoped-VMEM limit passed to Mosaic


def make_lm_head_plan(tokens, hidden, proj_dim, vocab, *,
                      logits_dtype=jnp.float32,
                      tm_target=512, tv_target=4096,
                      vmem_capacity_bytes=None):
    """Generation-aware tile plan. Call once (load/config time), not per forward."""
    del hidden  # kernel-1 blocks always span the full hidden dim
    cap = vmem_capacity_bytes if vmem_capacity_bytes else _vmem_capacity_bytes()
    # ~96 MiB budget on 128-MiB chips (v5e/v6e), ~40 MiB on v7x's 64 MiB per TC.
    budget = max(min(int(0.75 * cap), cap - 24 * _MiB), 16 * _MiB)
    out_bytes = np.dtype(logits_dtype).itemsize

    P_pad = _round_up(proj_dim, 128)
    tm = min(tm_target, _round_up(tokens, 16))
    M_pad = _round_up(tokens, tm)

    # Keep h fully VMEM-resident across the vocab sweep when small (decode /
    # moderate prefill): removes the per-vocab-tile re-read of h from HBM.
    h_bytes = M_pad * P_pad * 2
    h_resident = (2 * h_bytes) <= budget // 3

    # Grow the vocab tile as large as the VMEM budget allows (fewer grid steps,
    # larger unmasked lane-dense stores), shrinking only when the
    # double-buffered kernel-2 working set would overflow (v7x cap).
    tv = min(tv_target, _round_up(vocab, 128))
    while True:
        h_term = 2 * h_bytes if h_resident else 2 * tm * P_pad * 2
        ws = h_term + 2 * P_pad * tv * 2 + 2 * tm * tv * out_bytes
        if ws <= budget or tv <= 128:
            break
        tv = max(128, (tv // 2) // 128 * 128)
    V_pad = _round_up(vocab, tv)

    vmem_limit = min(cap, budget + 16 * _MiB)
    return LMHeadPlan(tm=tm, tv=tv, P_pad=P_pad, V_pad=V_pad, vocab=vocab,
                      logits_dtype=logits_dtype,
                      vmem_budget_bytes=int(budget),
                      vmem_limit_bytes=int(vmem_limit))


def prepare_gpt_lm_head_params(gamma, beta, w_proj_t, w_lm_t, plan):
    """One-time (parameter-load-time) prep: bf16 cast + zero-pad of the weights.

    w_proj_t: [H, P]  (transpose of nn.Linear(H, P).weight)
    w_lm_t:   [P, V]  (transpose of nn.Linear(P, V).weight)
    """
    H, P = w_proj_t.shape
    V = w_lm_t.shape[1]
    gamma2d = gamma.reshape(1, H).astype(jnp.float32)
    beta2d = beta.reshape(1, H).astype(jnp.float32)
    wproj = w_proj_t.astype(jnp.bfloat16)
    if plan.P_pad != P:
        wproj = jnp.pad(wproj, ((0, 0), (0, plan.P_pad - P)))
    wlm = w_lm_t.astype(jnp.bfloat16)
    if plan.P_pad != P or plan.V_pad != V:
        wlm = jnp.pad(wlm, ((0, plan.P_pad - P), (0, plan.V_pad - V)))
    return gamma2d, beta2d, wproj, wlm


# --------------------- Kernel 1: LayerNorm + project_out ---------------------
def _ln_proj_kernel(x_ref, gamma_ref, beta_ref, wproj_ref, h_ref):
    # x_ref:     (TM, H)  token tile (f32 or bf16 — model dtype passed through)
    # gamma/beta:(1, H)   layernorm affine params (f32)
    # wproj_ref: (H, Pp)  project_out weight (transposed, bf16, P padded to 128)
    # h_ref:     (TM, Pp) bf16 projected activations
    x = x_ref[...].astype(jnp.float32)           # LN statistics in f32
    mean = jnp.mean(x, axis=-1, keepdims=True)
    centered = x - mean
    var = jnp.mean(centered * centered, axis=-1, keepdims=True)
    ln = centered * jax.lax.rsqrt(var + LN_EPS)
    ln = ln * gamma_ref[...] + beta_ref[...]
    # bf16 MXU inputs, f32 accumulation.
    h = jnp.dot(ln.astype(jnp.bfloat16), wproj_ref[...],
                preferred_element_type=jnp.float32)
    h_ref[...] = h.astype(h_ref.dtype)


# --------------------- Kernel 2: lm_head matmul (vocab tiled) -----------------
def _vocab_matmul_kernel(h_ref, wlm_ref, o_ref):
    # h_ref:   (TM, Pp)  bf16 token tile
    # wlm_ref: (Pp, TV)  bf16 lm_head weight tile (transposed)
    # o_ref:   (TM, TV)  logits tile (plan.logits_dtype)
    o_ref[...] = jnp.dot(h_ref[...], wlm_ref[...],
                         preferred_element_type=jnp.float32).astype(o_ref.dtype)


def _vocab_matmul_resident_h_kernel(h_ref, wlm_ref, o_ref, *, tm):
    # h_ref is the FULL (M_pad, Pp) activation slab, VMEM-resident via a
    # constant index_map; slice this grid step's token tile in-VMEM instead of
    # re-DMAing h from HBM once per vocab tile.
    m = pl.program_id(1)
    start = pl.multiple_of(m * tm, tm)
    h = h_ref[pl.ds(start, tm), :]
    o_ref[...] = jnp.dot(h, wlm_ref[...],
                         preferred_element_type=jnp.float32).astype(o_ref.dtype)


def gpt_lm_head_forward(x, gamma2d, beta2d, wproj, wlm, plan, *,
                        return_padded=False, h_resident_override=None):
    """x: [B, S, H] (f32 or bf16). Returns logits [B, S, V] in plan.logits_dtype,
    or the padded 2-D [M_pad, V_pad] slab if return_padded=True (lets a fused
    downstream softmax/CE consume the logits without an un-pad copy)."""
    B, S, H = x.shape
    M = B * S
    P_pad, V_pad, tv = plan.P_pad, plan.V_pad, plan.tv

    tm = min(plan.tm, _round_up(M, 16))
    M_pad = _round_up(M, tm)

    x2d = x.reshape(M, H)                        # keep the model's dtype
    if M_pad != M:
        x2d = jnp.pad(x2d, ((0, M_pad - M), (0, 0)))

    # ---- Kernel 1: LN + project_out, grid over token tiles --------------------
    h = pl.pallas_call(
        _ln_proj_kernel,
        out_shape=jax.ShapeDtypeStruct((M_pad, P_pad), jnp.bfloat16),
        grid_spec=pltpu.PrefetchScalarGridSpec(
            num_scalar_prefetch=0,
            grid=(M_pad // tm,),
            in_specs=[
                pl.BlockSpec((tm, H), lambda m: (m, 0)),       # x tile
                pl.BlockSpec((1, H), lambda m: (0, 0)),        # gamma (resident)
                pl.BlockSpec((1, H), lambda m: (0, 0)),        # beta  (resident)
                # TODO(synk): on v7x with very large H*P, single-buffer this
                # grid-invariant block (pipeline_mode=pl.Buffered(1)) to halve
                # its VMEM footprint.
                pl.BlockSpec((H, P_pad), lambda m: (0, 0)),    # W_proj^T (resident)
            ],
            out_specs=pl.BlockSpec((tm, P_pad), lambda m: (m, 0)),
        ),
        compiler_params=pltpu.CompilerParams(
            dimension_semantics=("parallel",),
            vmem_limit_bytes=plan.vmem_limit_bytes,
        ),
    )(x2d, gamma2d, beta2d, wproj)

    # ---- Kernel 2: h @ W_lm^T, grid (vocab tiles, token tiles) ----------------
    # Token axis innermost so the W_lm tile stays VMEM-resident across the token
    # sweep (weights streamed from HBM exactly once); vocab is the only
    # "parallel" axis so a v7x megacore split halves each TC's weight stream.
    h_resident = 2 * (M_pad * P_pad * 2) <= plan.vmem_budget_bytes // 3
    if h_resident_override is not None:
        h_resident = bool(h_resident_override)
    if h_resident:
        kernel2 = functools.partial(_vocab_matmul_resident_h_kernel, tm=tm)
        h_spec = pl.BlockSpec((M_pad, P_pad), lambda v, m: (0, 0))
    else:
        kernel2 = _vocab_matmul_kernel
        h_spec = pl.BlockSpec((tm, P_pad), lambda v, m: (m, 0))

    out = pl.pallas_call(
        kernel2,
        out_shape=jax.ShapeDtypeStruct((M_pad, V_pad), plan.logits_dtype),
        grid_spec=pltpu.PrefetchScalarGridSpec(
            num_scalar_prefetch=0,
            grid=(V_pad // tv, M_pad // tm),
            in_specs=[
                h_spec,
                # TODO(synk): when M_pad//tm == 1 (decode) nothing hides the
                # next weight tile's DMA; deepen with pipeline_mode=pl.Buffered(3).
                pl.BlockSpec((P_pad, tv), lambda v, m: (0, v)),
            ],
            out_specs=pl.BlockSpec((tm, tv), lambda v, m: (m, v)),
        ),
        compiler_params=pltpu.CompilerParams(
            dimension_semantics=("parallel", "arbitrary"),
            vmem_limit_bytes=plan.vmem_limit_bytes,
        ),
    )(h, wlm)

    if return_padded:
        return out
    V = plan.vocab
    if M_pad == M and V_pad == V:
        return out.reshape(B, S, V)
    # TODO(synk): prefer return_padded=True plus a fused, masked softmax/CE
    # downstream to avoid this full-logits un-pad copy in production.
    return out[:M, :V].reshape(B, S, V)


def reference_forward(x, gamma, beta, w_proj_t, w_lm_t):
    # Mirrors the kernel math (f32 LN stats, bf16 MXU inputs, f32 accumulation).
    xf = x.astype(jnp.float32)
    mean = jnp.mean(xf, axis=-1, keepdims=True)
    var = jnp.mean((xf - mean) ** 2, axis=-1, keepdims=True)
    ln = (xf - mean) * jax.lax.rsqrt(var + LN_EPS) * gamma + beta
    h = jnp.dot(ln.astype(jnp.bfloat16), w_proj_t.astype(jnp.bfloat16),
                preferred_element_type=jnp.float32).astype(jnp.bfloat16)
    return jnp.dot(h, w_lm_t.astype(jnp.bfloat16),
                   preferred_element_type=jnp.float32)


if __name__ == "__main__":
    # Small synthetic OPT-like config:
    #   do_layer_norm_before=True, _remove_final_layer_norm=False -> LayerNorm present
    #   word_embed_proj_dim != hidden_size                        -> project_out present
    B, S = 2, 8
    HIDDEN = 32          # config.hidden_size
    PROJ = 16            # config.word_embed_proj_dim
    VOCAB = 256          # config.vocab_size

    key = jax.random.PRNGKey(0)
    kx, kg, kb, kp, kl = jax.random.split(key, 5)

    x = jax.random.normal(kx, (B, S, HIDDEN), dtype=jnp.float32)
    gamma = 1.0 + 0.01 * jax.random.normal(kg, (HIDDEN,), dtype=jnp.float32)
    beta = 0.01 * jax.random.normal(kb, (HIDDEN,), dtype=jnp.float32)
    # nn.Linear weight is (out, in); we pass the transpose (in, out).
    w_proj_t = 0.05 * jax.random.normal(kp, (HIDDEN, PROJ), dtype=jnp.float32)
    w_lm_t = 0.05 * jax.random.normal(kl, (PROJ, VOCAB), dtype=jnp.float32)

    # One-time plan + weight prep (load time), then forward.
    plan = make_lm_head_plan(tokens=B * S, hidden=HIDDEN, proj_dim=PROJ, vocab=VOCAB)
    params = prepare_gpt_lm_head_params(gamma, beta, w_proj_t, w_lm_t, plan)

    logits = gpt_lm_head_forward(x, *params, plan)
    logits = jax.block_until_ready(logits)
    ref = reference_forward(x, gamma, beta, w_proj_t, w_lm_t)
    assert logits.shape == (B, S, VOCAB)
    assert jnp.allclose(logits, ref, atol=1e-2, rtol=1e-2), "mismatch (resident-h path)"

    # Also exercise the streaming-h (non-resident) kernel-2 path.
    logits2 = gpt_lm_head_forward(x, *params, plan, h_resident_override=False)
    logits2 = jax.block_until_ready(logits2)
    assert jnp.allclose(logits2, ref, atol=1e-2, rtol=1e-2), "mismatch (streaming-h path)"

    # And a ragged case (M and V padding both active, un-pad slice branch).
    B2, S2, V2 = 1, 5, 200
    x2 = jax.random.normal(kx, (B2, S2, HIDDEN), dtype=jnp.float32)
    w_lm2_t = 0.05 * jax.random.normal(kl, (PROJ, V2), dtype=jnp.float32)
    plan2 = make_lm_head_plan(tokens=B2 * S2, hidden=HIDDEN, proj_dim=PROJ, vocab=V2)
    params2 = prepare_gpt_lm_head_params(gamma, beta, w_proj_t, w_lm2_t, plan2)
    logits3 = jax.block_until_ready(gpt_lm_head_forward(x2, *params2, plan2))
    ref3 = reference_forward(x2, gamma, beta, w_proj_t, w_lm2_t)
    assert logits3.shape == (B2, S2, V2)
    assert jnp.allclose(logits3, ref3, atol=1e-2, rtol=1e-2), "mismatch (padded path)"

    print("KERNEL_OK")
</pallas_src>

<mosaic_0001>
module attributes {stable_mosaic.version = 11 : i64} {
  func.func @_ln_proj_kernel(%arg0: i32, %arg1: memref<16x32xf32, #tpu.memory_space<vmem>>, %arg2: memref<1x32xf32, #tpu.memory_space<vmem>>, %arg3: memref<1x32xf32, #tpu.memory_space<vmem>>, %arg4: memref<32x128xbf16, #tpu.memory_space<vmem>>, %arg5: memref<16x128xbf16, #tpu.memory_space<vmem>>) attributes {dimension_semantics = [#tpu.dimension_semantics<parallel>], iteration_bounds = array<i64: 1>, scalar_prefetch = 0 : i64, scratch_operands = 0 : i64, tpu.core_type = #tpu.core_type<tc>, window_params = [{transform_indices = @transform_0, window_bounds = array<i64: 16, 32>}, {pipeline_mode = #tpu.pipeline_mode<synchronous>, transform_indices = @transform_1, window_bounds = array<i64: 1, 32>}, {pipeline_mode = #tpu.pipeline_mode<synchronous>, transform_indices = @transform_2, window_bounds = array<i64: 1, 32>}, {pipeline_mode = #tpu.pipeline_mode<synchronous>, transform_indices = @transform_3, window_bounds = array<i64: 32, 128>}, {transform_indices = @transform_4, window_bounds = array<i64: 16, 128>}]} {
    %c0 = arith.constant 0 : index
    %c0_0 = arith.constant 0 : index
    %0 = vector.load %arg1[%c0, %c0_0] : memref<16x32xf32, #tpu.memory_space<vmem>>, vector<16x32xf32>
    %cst = arith.constant dense<0.000000e+00> : vector<16xf32>
    %1 = vector.multi_reduction <add>, %0, %cst [1] : vector<16x32xf32> to vector<16xf32>
    %2 = vector.shape_cast %1 : vector<16xf32> to vector<16x1xf32>
    %cst_1 = arith.constant 3.200000e+01 : f32
    %3 = vector.broadcast %cst_1 : f32 to vector<16x1xf32>
    %4 = arith.divf %2, %3 : vector<16x1xf32>
    %5 = vector.broadcast %4 : vector<16x1xf32> to vector<16x32xf32>
    %6 = arith.subf %0, %5 : vector<16x32xf32>
    %7 = arith.mulf %6, %6 : vector<16x32xf32>
    %cst_2 = arith.constant dense<0.000000e+00> : vector<16xf32>
    %8 = vector.multi_reduction <add>, %7, %cst_2 [1] : vector<16x32xf32> to vector<16xf32>
    %9 = vector.shape_cast %8 : vector<16xf32> to vector<16x1xf32>
    %cst_3 = arith.constant 3.200000e+01 : f32
    %10 = vector.broadcast %cst_3 : f32 to vector<16x1xf32>
    %11 = arith.divf %9, %10 : vector<16x1xf32>
    %cst_4 = arith.constant 9.99999974E-6 : f32
    %12 = vector.broadcast %cst_4 : f32 to vector<16x1xf32>
    %13 = arith.addf %11, %12 : vector<16x1xf32>
    %14 = math.rsqrt %13 : vector<16x1xf32>
    %15 = vector.broadcast %14 : vector<16x1xf32> to vector<16x32xf32>
    %16 = arith.mulf %6, %15 : vector<16x32xf32>
    %c0_5 = arith.constant 0 : index
    %c0_6 = arith.constant 0 : index
    %17 = vector.load %arg2[%c0_5, %c0_6] : memref<1x32xf32, #tpu.memory_space<vmem>>, vector<1x32xf32>
    %18 = vector.broadcast %17 : vector<1x32xf32> to vector<16x32xf32>
    %19 = arith.mulf %16, %18 : vector<16x32xf32>
    %c0_7 = arith.constant 0 : index
    %c0_8 = arith.constant 0 : index
    %20 = vector.load %arg3[%c0_7, %c0_8] : memref<1x32xf32, #tpu.memory_space<vmem>>, vector<1x32xf32>
    %21 = vector.broadcast %20 : vector<1x32xf32> to vector<16x32xf32>
    %22 = arith.addf %19, %21 : vector<16x32xf32>
    %23 = arith.truncf %22 : vector<16x32xf32> to vector<16x32xbf16>
    %c0_9 = arith.constant 0 : index
    %c0_10 = arith.constant 0 : index
    %24 = vector.load %arg4[%c0_9, %c0_10] : memref<32x128xbf16, #tpu.memory_space<vmem>>, vector<32x128xbf16>
    %cst_11 = arith.constant dense<0.000000e+00> : vector<16x128xf32>
    %25 = tpu.matmul %23, %24, %cst_11 {dimension_numbers = #tpu.dot_dimension_numbers<[1], [0], [0], [1], [0, 0, 1, 1], [], []>} : vector<16x32xbf16>, vector<32x128xbf16>, vector<16x128xf32> -> vector<16x128xf32>
    %26 = arith.truncf %25 : vector<16x128xf32> to vector<16x128xbf16>
    %c0_12 = arith.constant 0 : index
    %c0_13 = arith.constant 0 : index
    %27 = vector.load %arg5[%c0_12, %c0_13] : memref<16x128xbf16, #tpu.memory_space<vmem>>, vector<16x128xbf16>
    tpu.vector_store %arg5[%c0_12, %c0_13], %26 {strides = array<i32>} : memref<16x128xbf16, #tpu.memory_space<vmem>>, vector<16x128xbf16>,
    return
  }
  func.func @transform_0(%arg0: i32) -> (i32, i32) {
    %c0_i32 = arith.constant 0 : i32
    %c0_i32_0 = arith.constant 0 : i32
    return %arg0, %c0_i32 : i32, i32
  }
  func.func @transform_1(%arg0: i32) -> (i32, i32) {
    %c0_i32 = arith.constant 0 : i32
    %c0_i32_0 = arith.constant 0 : i32
    %c0_i32_1 = arith.constant 0 : i32
    return %c0_i32, %c0_i32_0 : i32, i32
  }
  func.func @transform_2(%arg0: i32) -> (i32, i32) {
    %c0_i32 = arith.constant 0 : i32
    %c0_i32_0 = arith.constant 0 : i32
    %c0_i32_1 = arith.constant 0 : i32
    return %c0_i32, %c0_i32_0 : i32, i32
  }
  func.func @transform_3(%arg0: i32) -> (i32, i32) {
    %c0_i32 = arith.constant 0 : i32
    %c0_i32_0 = arith.constant 0 : i32
    %c0_i32_1 = arith.constant 0 : i32
    return %c0_i32, %c0_i32_0 : i32, i32
  }
  func.func @transform_4(%arg0: i32) -> (i32, i32) {
    %c0_i32 = arith.constant 0 : i32
    %c0_i32_0 = arith.constant 0 : i32
    return %arg0, %c0_i32 : i32, i32
  }
}

</mosaic_0001>

<llo_original>
// kernel: tpu_custom_call.1
$region0: #{tpu_custom_call.1}
  #allocation0 [shape = 'u32[]', space=smem, size = 0x4, offset = 0x4, fixed_abs, tag = 'smem constant byte address 0x4 - core index']
  #allocation1 [shape = 'u32[144,128]{1,0:T(1,128)}', space=vmem, size = 0x12000, scoped, tag = 'internal scratch']
  %s0 = inlined_call_operand.hbm [shape: f32[16,32], index: 0, kind: input, shape index: {}]
  %s1 = inlined_call_operand.vmem [shape: f32[1,32], index: 1, kind: input, shape index: {}]
  %s2 = inlined_call_operand.vmem [shape: f32[1,32], index: 2, kind: input, shape index: {}]
  %s3 = inlined_call_operand.hbm [shape: bf16[32,128], index: 3, kind: input, shape index: {}]
  %s4 = inlined_call_operand.hbm [shape: bf16[16,128], index: 4, kind: output, shape index: {}]
  %s5 = sld [smem:[#allocation0]]
  $region34: #{tpu_custom_call.1} parent=0
    _
  %s7 = ssub.s32 1, %s5
  %s8 = scalar_select 0, %s7, %s5
  $region1: #{tpu_custom_call.1} parent=0
    #allocation2 [shape = 'u8[8192]{0}', space=vmem, size = 0x2000, scoped, tag = 'input window, operand 0, single buffered']
    #allocation3 [shape = 's32[1]{0}', space=sflag, size = 0x4, scoped, tag = 'scoped memory for tpu_custom_call.1']
    #allocation4 [shape = 's32[1]{0}', space=sflag, size = 0x4, scoped, tag = 'scoped memory for tpu_custom_call.1']
    #allocation5 [shape = 'u8[8192]{0}', space=vmem, size = 0x2000, scoped, tag = 'input window, operand 3, single buffered']
    #allocation6 [shape = 's32[1]{0}', space=sflag, size = 0x4, scoped, tag = 'scoped memory for tpu_custom_call.1']
    #allocation7 [shape = 'u8[4096]{0}', space=vmem, size = 0x1000, scoped, tag = 'output window, operand 0, single buffered']
    %9 = vsyncpa [#allocation3], 0
    %10 = vsyncpa [#allocation6], 0
    %11 = vsyncpa [#allocation4], 0
    // Predicated region
    $region2: #{tpu_custom_call.1} parent=1 // pred_check
      _
    $region3: #{tpu_custom_call.1} parent=1 // pred_check_branch
      %13 = sbr.rel (0) target = $region5
    $region4: #{tpu_custom_call.1} parent=1 // pred_region
      %s15 = ssub.s32 256, 256
      %16 = vsyncadd [#allocation3], %s15
      %s17 = sshll.u32 [#allocation2], 4
      %s18 = int_to_ptr.vmem [resolvable:$true] %s17
      %23 = dma.hbm_to_vmem [thread:$0]  %s0, 256, %s18, [#allocation3], 128, 128, 8
    $region5: #{tpu_custom_call.1} parent=1 // pred_fallthru
      _
    // Predicated region
    $region6: #{tpu_custom_call.1} parent=1 // pred_check
      _
    $region7: #{tpu_custom_call.1} parent=1 // pred_check_branch
      %25 = sbr.rel (0) target = $region9
    $region8: #{tpu_custom_call.1} parent=1 // pred_region
      _
    $region9: #{tpu_custom_call.1} parent=1 // pred_fallthru
      _
    // Predicated region
    $region10: #{tpu_custom_call.1} parent=1 // pred_check
      _
    $region11: #{tpu_custom_call.1} parent=1 // pred_check_branch
      %27 = sbr.rel (0) target = $region13
    $region12: #{tpu_custom_call.1} parent=1 // pred_region
      _
    $region13: #{tpu_custom_call.1} parent=1 // pred_fallthru
      _
    // Predicated region
    $region14: #{tpu_custom_call.1} parent=1 // pred_check
      _
    $region15: #{tpu_custom_call.1} parent=1 // pred_check_branch
      %29 = sbr.rel (0) target = $region17
    $region16: #{tpu_custom_call.1} parent=1 // pred_region
      %s31 = ssub.s32 256, 256
      %32 = vsyncadd [#allocation6], %s31
      %s33 = sshll.u32 [#allocation5], 4
      %s34 = int_to_ptr.vmem [resolvable:$true] %s33
      %39 = dma.hbm_to_vmem [thread:$0]  %s3, 256, %s34, [#allocation6], 64, 64, 4
    $region17: #{tpu_custom_call.1} parent=1 // pred_fallthru
      _
    // Predicated region
    $region18: #{tpu_custom_call.1} parent=1 // pred_check
      _
    $region19: #{tpu_custom_call.1} parent=1 // pred_check_branch
      %41 = sbr.rel (0) target = $region21
    $region20: #{tpu_custom_call.1} parent=1 // pred_region
      %42 = dma.done [#allocation3], 256
    $region21: #{tpu_custom_call.1} parent=1 // pred_fallthru
      _
    // Predicated region
    $region22: #{tpu_custom_call.1} parent=1 // pred_check
      _
    $region23: #{tpu_custom_call.1} parent=1 // pred_check_branch
      %44 = sbr.rel (0) target = $region25
    $region24: #{tpu_custom_call.1} parent=1 // pred_region
      %45 = dma.done [#allocation6], 256
    $region25: #{tpu_custom_call.1} parent=1 // pred_fallthru
      _
    %v47 = vld [vmem:[#allocation2] sm:$0xff]
    %v48 = vld [vmem:[#allocation2 + $0x8] sm:$0xff]
    %vm49 = vcmask 261120
    %v50 = vsel %vm49, %v47, 0.0
    %51 = vadd.xlane.f32.xlu0 %v50
    %v52 = vpop.xlane.xlu0 %51
    %v53 = vsel %vm49, %v48, 0.0
    %54 = vadd.xlane.f32.xlu0 %v53
    %v55 = vpop.xlane.xlu0 %54
    %v56 = vrcp.pop 32.0
    %v57 = vmul.f32 %v52, %v56
    %v58 = vmul.f32 %v55, %v56
    %v59 = vsub.f32 %v47, %v57
    %v60 = vsub.f32 %v48, %v58
    %v61 = vmul.f32 %v59, %v59
    %v62 = vmul.f32 %v60, %v60
    %v63 = vsel %vm49, %v61, 0.0
    %64 = vadd.xlane.f32.xlu0 %v63
    %v65 = vpop.xlane.xlu0 %64
    %v66 = vsel %vm49, %v62, 0.0
    %67 = vadd.xlane.f32.xlu0 %v66
    %v68 = vpop.xlane.xlu0 %67
    %v69 = vmul.f32 %v65, %v56
    %v70 = vmul.f32 %v68, %v56
    %v71 = vadd.f32 %v69, 1e-05
    %v72 = vadd.f32 %v70, 1e-05
    %v73 = vrsqrt.pop %v71
    %v74 = vrsqrt.pop %v72
    %v75 = vmul.f32 %v59, %v73
    %v76 = vmul.f32 %v60, %v74
    %v77 = vld [vmem:[%s1] sm:$0x1]
    %v79 = vlaneseq
    %v80 = vshrl.u32 %v79, 7
    %v81 = vsub.s32 0, %v80
    %v82 = vrot.slane %v77, %v81
    %v84 = vmul.f32 %v75, %v82
    %v85 = vmul.f32 %v76, %v82
    %v86 = vld [vmem:[%s2] sm:$0x1]
    %v88 = vlaneseq
    %v89 = vshrl.u32 %v88, 7
    %v90 = vsub.s32 0, %v89
    %v91 = vrot.slane %v86, %v90
    %v93 = vadd.f32 %v84, %v91
    %v94 = vadd.f32 %v85, %v91
    %v95 = vpack.c.bf16 %v94, %v93
    %v96 = vld [vmem:[#allocation5] sm:$0xf]
    %v97 = vld [vmem:[#allocation5 + $0x4] sm:$0xf]
    %v98 = vld [vmem:[#allocation5 + $0x8] sm:$0xf]
    %v99 = vld [vmem:[#allocation5 + $0xc] sm:$0xf]
    %v104 = vunpack.c.l.b16 %v96
    %v105 = vunpack.c.l.b16 %v97
    %v106 = vunpack.c.l.b16 %v98
    %v107 = vunpack.c.l.b16 %v99
    %v108 = vpack.c.b16 %v105, %v104
    %v109 = vpack.c.b16 %v107, %v106
    %v113 = vsel %vm49, %v95, 0
    %115 = vmatprep.subr.bf16.mxu0 0
    %116 = vmatpush1.bf16.msra.mxu0 %v108
    %117 = vmatprep.subr.bf16.mxu0 0
    %118 = vmatpush1.bf16.msra.mxu0 %v109
    %119 = vmatprep.subr.bf16.mxu0 0
    %120 = vmatpush1.bf16.msra.mxu0 0
    %121 = vmatprep.subr.bf16.mxu0 0
    %122 = vmatpush1.bf16.msra.mxu0 0
    %123 = vmatprep.subr.bf16.mxu0 0
    %124 = vmatpush1.bf16.msra.mxu0 0
    %125 = vmatprep.subr.bf16.mxu0 0
    %126 = vmatpush1.bf16.msra.mxu0 0
    %127 = vmatprep.subr.bf16.mxu0 0
    %128 = vmatpush1.bf16.msra.mxu0 0
    %129 = vmatprep.subr.bf16.mxu0 0
    %130 = vmatpush1.bf16.msra.mxu0 0
    %131 = vmatprep.subr.bf16.mxu0 0
    %132 = vmatpush1.bf16.msra.mxu0 0
    %133 = vmatprep.subr.bf16.mxu0 0
    %134 = vmatpush1.bf16.msra.mxu0 0
    %135 = vmatprep.subr.bf16.mxu0 0
    %136 = vmatpush1.bf16.msra.mxu0 0
    %137 = vmatprep.subr.bf16.mxu0 0
    %138 = vmatpush1.bf16.msra.mxu0 0
    %139 = vmatprep.subr.bf16.mxu0 0
    %140 = vmatpush1.bf16.msra.mxu0 0
    %141 = vmatprep.subr.bf16.mxu0 0
    %142 = vmatpush1.bf16.msra.mxu0 0
    %143 = vmatprep.subr.bf16.mxu0 0
    %144 = vmatpush1.bf16.msra.mxu0 0
    %145 = vmatprep.subr.bf16.mxu0 0
    %146 = vmatpush1.bf16.msra.mxu0 0
    %147 = vmatprep.mubr.bf16.mxu0 0
    %148 = vmatmul.mubr.bf16.gmra.mrb[0].mxu0 %v113
    %v149 = vpop.f32.mrb[0].mxu0
    %v150 = vadd.f32 0.0, %v149
    %v151 = vpop.f32.mrb[0].mxu0
    %v152 = vpop.f32.mrb[0].mxu0
    %v153 = vadd.f32 0.0, %v152
    %v154 = vpop.f32.mrb[0].mxu0
    %155 = vdwg.mxu0
    %v156 = vpack.c.bf16 %v153, %v150
    %v158 = vunpack.c.l.b16 %v156
    %v159 = vunpack.c.h.b16 %v156
    %v160 = vpack.c.b16 %v158, %v158
    %v161 = vpack.c.b16 %v159, %v159
    %164 = vst [vmem:[#allocation7] sm:$0xf] %v160
    %165 = vst [vmem:[#allocation7 + $0x4] sm:$0xf] %v161
    // Predicated region
    $region26: #{tpu_custom_call.1} parent=1 // pred_check
      _
    $region27: #{tpu_custom_call.1} parent=1 // pred_check_branch
      %167 = sbr.rel (0) target = $region29
    $region28: #{tpu_custom_call.1} parent=1 // pred_region
      %s169 = ssub.s32 128, 128
      %170 = vsyncadd [#allocation4], %s169
      %s171 = sshll.u32 [#allocation7], 4
      %s172 = int_to_ptr.vmem [resolvable:$true] %s171
      %177 = dma.vmem_to_hbm [thread:$0]  %s172, 128, %s4, [#allocation4], 64, 64, 4
    $region29: #{tpu_custom_call.1} parent=1 // pred_fallthru
      _
    // Predicated region
    $region30: #{tpu_custom_call.1} parent=1 // pred_check
      _
    $region31: #{tpu_custom_call.1} parent=1 // pred_check_branch
      %179 = sbr.rel (0) target = $region33
    $region32: #{tpu_custom_call.1} parent=1 // pred_region
      %180 = dma.done [#allocation4], 128
    $region33: #{tpu_custom_call.1} parent=1 // pred_fallthru
      _
    %181 = vsyncpa [#allocation3], 1
    %182 = vsyncpa [#allocation6], 1
    %183 = vsyncpa [#allocation4], 1

</llo_original>
